<compile_context>
chip_gen: v7x
topology: tpu7x:2x2x1
jax: 0.10.0
libtpu: 0.0.40
codegen_flags: <defaults>
</compile_context>

<pallas_src>
import math

import jax
import jax.numpy as jnp
from jax.experimental import pallas as pl
from jax.experimental.pallas import tpu as pltpu

_LANE = 128
_MAX_LANES = 16384  # cap for lcm-based lane packing (64 KiB f32 per param row)


def _prenorm_kernel(x_ref, shift_ref, scale_ref, o_ref):
    # Params are f32 (1, lanes); compute in f32, cast once on store.
    x = x_ref[...].astype(jnp.float32)
    o_ref[...] = ((x + shift_ref[...]) * scale_ref[...]).astype(o_ref.dtype)


def _round_up(a, b):
    return ((a + b - 1) // b) * b


def _vmem_capacity_bytes():
    try:
        return int(pltpu.get_tpu_info().vmem_capacity_bytes)
    except Exception:
        return 64 << 20  # conservative: v7x per-TC VMEM


def _default_block_bytes():
    try:
        kind = jax.devices()[0].device_kind.lower()
    except Exception:
        return 2 << 20
    if "v5 lite" in kind or "v5e" in kind or "v5lite" in kind:
        return 1 << 20  # v5e: ~0.82 TB/s, 1 MiB tiles already amortize step cost
    return 4 << 20      # v6e / v7x: larger tiles amortize ~0.35us/step overhead


def prenorm_forward(x, shift=None, scale=None, *, target_block_bytes=None):
    """PreNormLayer.forward: out = (x + shift) * scale, broadcasting on last axis."""
    assert shift is not None or scale is not None

    def _units(p):
        p = jnp.asarray(p)
        return 1 if p.ndim == 0 else int(p.shape[-1])

    if shift is not None and scale is not None:
        n_units = _units(shift)
        assert _units(scale) == n_units, "shift/scale n_units mismatch"
    elif shift is not None:
        n_units = _units(shift)
    else:
        n_units = _units(scale)

    dtype = x.dtype
    orig_shape = x.shape
    assert n_units == 1 or orig_shape[-1] == n_units, (
        f"Expected last dim {n_units}, got {orig_shape[-1]}")
    if x.size == 0:
        return x

    # Parameters stay float32 (matching the torch buffers).
    shift_f = (jnp.zeros((n_units,), jnp.float32) if shift is None
               else jnp.asarray(shift).reshape(n_units).astype(jnp.float32))
    scale_f = (jnp.ones((n_units,), jnp.float32) if scale is None
               else jnp.asarray(scale).reshape(n_units).astype(jnp.float32))

    x2d = x.reshape(-1, n_units)
    rows = x2d.shape[0]
    total = rows * n_units

    # ---- lane packing: make the last dim a multiple of 128 lanes ----
    if n_units % _LANE == 0:
        pack, lanes = 1, n_units
    else:
        lcm = n_units * _LANE // math.gcd(n_units, _LANE)
        if lcm <= _MAX_LANES:
            pack, lanes = lcm // n_units, lcm
        else:
            pack, lanes = 1, n_units  # rare fallback: partial-lane stores

    itemsize = jnp.dtype(dtype).itemsize
    min_sublane = max(8, 32 // itemsize)  # 8 f32 / 16 bf16 / 32 int8
    row_bytes = lanes * itemsize

    packed_rows = -(-rows // pack)
    padded_rows = packed_rows * pack

    # Only pad to a multiple of `pack` (< 128 rows). The ragged last *tile* is
    # handled by the grid / boundary masking, not by wrapper-side padding.
    if padded_rows != rows:
        x2d = jnp.pad(x2d, ((0, padded_rows - rows), (0, 0)))
    x_packed = x2d.reshape(packed_rows, lanes)

    # ---- tile sizing (hardware-aware) ----
    vmem_cap = _vmem_capacity_bytes()
    usable_vmem = max(16 << 20, vmem_cap - (8 << 20))
    if target_block_bytes is None:
        target_block_bytes = _default_block_bytes()
    target_block_bytes = max(row_bytes * min_sublane,
                             min(target_block_bytes, usable_vmem // 8))

    tile_rows = max(min_sublane,
                    (target_block_bytes // row_bytes) // min_sublane * min_sublane)
    # Keep >= ~4 grid steps when there is enough data so v7x can shard the row
    # grid across its two TensorCores.
    if packed_rows >= 4 * min_sublane:
        tile_rows = min(tile_rows, _round_up(-(-packed_rows // 4), min_sublane))
    if tile_rows >= packed_rows:
        tile_rows = packed_rows  # single block == full array dim (always legal)

    grid = -(-packed_rows // tile_rows)

    shift_l = jnp.tile(shift_f, pack).reshape(1, lanes)
    scale_l = jnp.tile(scale_f, pack).reshape(1, lanes)

    block_bytes = tile_rows * lanes * itemsize
    f32_block = tile_rows * lanes * 4
    vmem_limit = int(min(usable_vmem, 4 * block_bytes + 2 * f32_block + (4 << 20)))

    out_packed = pl.pallas_call(
        _prenorm_kernel,
        out_shape=jax.ShapeDtypeStruct((packed_rows, lanes), dtype),
        grid_spec=pltpu.PrefetchScalarGridSpec(
            num_scalar_prefetch=0,
            grid=(grid,),
            in_specs=[
                pl.BlockSpec((tile_rows, lanes), lambda i: (i, 0)),
                pl.BlockSpec((1, lanes), lambda i: (0, 0)),
                pl.BlockSpec((1, lanes), lambda i: (0, 0)),
            ],
            out_specs=pl.BlockSpec((tile_rows, lanes), lambda i: (i, 0)),
        ),
        compiler_params=pltpu.CompilerParams(
            dimension_semantics=("parallel",),
            vmem_limit_bytes=vmem_limit,
        ),
    )(x_packed, shift_l, scale_l)

    if padded_rows == rows:
        # Pure row-major reinterpretation: no extra HBM traffic.
        return out_packed.reshape(orig_shape)
    return out_packed.reshape(-1)[:total].reshape(orig_shape)


if __name__ == "__main__":
    key = jax.random.PRNGKey(0)
    keys = jax.random.split(key, 10)

    def ref_fn(x, shift, scale):
        y = x.astype(jnp.float32)
        if shift is not None:
            y = y + jnp.asarray(shift, jnp.float32)
        if scale is not None:
            y = y * jnp.asarray(scale, jnp.float32)
        return y.astype(x.dtype)

    # Case 1: n_units=32 (4 groups packed per 128-lane row), f32, no padding.
    n1 = 32
    sh1 = jax.random.normal(keys[0], (n1,), jnp.float32)
    sc1 = jax.random.uniform(keys[1], (n1,), jnp.float32) + 0.5
    x1 = jax.random.normal(keys[2], (2, 8, n1), jnp.float32)
    o1 = jax.block_until_ready(prenorm_forward(x1, sh1, sc1))
    assert o1.shape == x1.shape and o1.dtype == x1.dtype
    assert jnp.allclose(o1, ref_fn(x1, sh1, sc1), atol=1e-5, rtol=1e-5), "case 1"

    # Case 2: n_units=48 -> lcm packing (lanes=384, pack=8), bf16, 1-row pack pad.
    n2 = 48
    sh2 = jax.random.normal(keys[3], (n2,), jnp.float32)
    sc2 = jax.random.uniform(keys[4], (n2,), jnp.float32) + 0.5
    x2 = jax.random.normal(keys[5], (3, 5, n2), jnp.bfloat16)
    o2 = jax.block_until_ready(prenorm_forward(x2, sh2, sc2))
    assert o2.shape == x2.shape and o2.dtype == x2.dtype
    assert jnp.allclose(o2.astype(jnp.float32),
                        ref_fn(x2, sh2, sc2).astype(jnp.float32),
                        atol=2e-2, rtol=2e-2), "case 2"

    # Case 3: n_units=1 (scalar broadcast over any trailing dim), shift only.
    x3 = jax.random.normal(keys[6], (4, 6), jnp.float32)
    sh3 = jax.random.normal(keys[7], (1,), jnp.float32)
    o3 = jax.block_until_ready(prenorm_forward(x3, shift=sh3, scale=None))
    assert o3.shape == x3.shape and o3.dtype == x3.dtype
    assert jnp.allclose(o3, ref_fn(x3, sh3, None), atol=1e-5, rtol=1e-5), "case 3"

    # Case 4: multi-step grid with a ragged last block (no tile-multiple padding).
    n4 = 64
    sh4 = jax.random.normal(keys[8], (n4,), jnp.float32)
    sc4 = jax.random.uniform(keys[9], (n4,), jnp.float32) + 0.5
    x4 = jax.random.normal(keys[0], (3, 100, n4), jnp.float32)
    o4 = jax.block_until_ready(prenorm_forward(x4, sh4, sc4))
    assert o4.shape == x4.shape and o4.dtype == x4.dtype
    assert jnp.allclose(o4, ref_fn(x4, sh4, sc4), atol=1e-5, rtol=1e-5), "case 4"

    print("KERNEL_OK")
</pallas_src>

<mosaic_0001>
module attributes {stable_mosaic.version = 11 : i64} {
  func.func @_prenorm_kernel(%arg0: i32, %arg1: memref<4x128xf32, #tpu.memory_space<vmem>>, %arg2: memref<1x128xf32, #tpu.memory_space<vmem>>, %arg3: memref<1x128xf32, #tpu.memory_space<vmem>>, %arg4: memref<4x128xf32, #tpu.memory_space<vmem>>) attributes {dimension_semantics = [#tpu.dimension_semantics<parallel>], iteration_bounds = array<i64: 1>, scalar_prefetch = 0 : i64, scratch_operands = 0 : i64, tpu.core_type = #tpu.core_type<tc>, window_params = [{transform_indices = @transform_0, window_bounds = array<i64: 4, 128>}, {pipeline_mode = #tpu.pipeline_mode<synchronous>, transform_indices = @transform_1, window_bounds = array<i64: 1, 128>}, {pipeline_mode = #tpu.pipeline_mode<synchronous>, transform_indices = @transform_2, window_bounds = array<i64: 1, 128>}, {transform_indices = @transform_3, window_bounds = array<i64: 4, 128>}]} {
    %c0 = arith.constant 0 : index
    %c0_0 = arith.constant 0 : index
    %0 = vector.load %arg1[%c0, %c0_0] : memref<4x128xf32, #tpu.memory_space<vmem>>, vector<4x128xf32>
    %c0_1 = arith.constant 0 : index
    %c0_2 = arith.constant 0 : index
    %1 = vector.load %arg2[%c0_1, %c0_2] : memref<1x128xf32, #tpu.memory_space<vmem>>, vector<1x128xf32>
    %2 = vector.broadcast %1 : vector<1x128xf32> to vector<4x128xf32>
    %3 = arith.addf %0, %2 : vector<4x128xf32>
    %c0_3 = arith.constant 0 : index
    %c0_4 = arith.constant 0 : index
    %4 = vector.load %arg3[%c0_3, %c0_4] : memref<1x128xf32, #tpu.memory_space<vmem>>, vector<1x128xf32>
    %5 = vector.broadcast %4 : vector<1x128xf32> to vector<4x128xf32>
    %6 = arith.mulf %3, %5 : vector<4x128xf32>
    %c0_5 = arith.constant 0 : index
    %c0_6 = arith.constant 0 : index
    %7 = vector.load %arg4[%c0_5, %c0_6] : memref<4x128xf32, #tpu.memory_space<vmem>>, vector<4x128xf32>
    tpu.vector_store %arg4[%c0_5, %c0_6], %6 {strides = array<i32>} : memref<4x128xf32, #tpu.memory_space<vmem>>, vector<4x128xf32>,
    return
  }
  func.func @transform_0(%arg0: i32) -> (i32, i32) {
    %c0_i32 = arith.constant 0 : i32
    %c0_i32_0 = arith.constant 0 : i32
    return %arg0, %c0_i32 : i32, i32
  }
  func.func @transform_1(%arg0: i32) -> (i32, i32) {
    %c0_i32 = arith.constant 0 : i32
    %c0_i32_0 = arith.constant 0 : i32
    %c0_i32_1 = arith.constant 0 : i32
    return %c0_i32, %c0_i32_0 : i32, i32
  }
  func.func @transform_2(%arg0: i32) -> (i32, i32) {
    %c0_i32 = arith.constant 0 : i32
    %c0_i32_0 = arith.constant 0 : i32
    %c0_i32_1 = arith.constant 0 : i32
    return %c0_i32, %c0_i32_0 : i32, i32
  }
  func.func @transform_3(%arg0: i32) -> (i32, i32) {
    %c0_i32 = arith.constant 0 : i32
    %c0_i32_0 = arith.constant 0 : i32
    return %arg0, %c0_i32 : i32, i32
  }
}

</mosaic_0001>

<llo_original>
// kernel: tpu_custom_call.1
$region0: #{tpu_custom_call.1}
  #allocation0 [shape = 'u32[]', space=smem, size = 0x4, offset = 0x4, fixed_abs, tag = 'smem constant byte address 0x4 - core index']
  #allocation1 [shape = 'u32[144,128]{1,0:T(1,128)}', space=vmem, size = 0x12000, scoped, tag = 'internal scratch']
  %s0 = inlined_call_operand.hbm [shape: f32[4,128], index: 0, kind: input, shape index: {}]
  %s1 = inlined_call_operand.vmem [shape: f32[1,128], index: 1, kind: input, shape index: {}]
  %s2 = inlined_call_operand.vmem [shape: f32[1,128], index: 2, kind: input, shape index: {}]
  %s3 = inlined_call_operand.hbm [shape: f32[4,128], index: 3, kind: output, shape index: {}]
  %s4 = sld [smem:[#allocation0]]
  $region26: #{tpu_custom_call.1} parent=0
    _
  %s6 = ssub.s32 1, %s4
  %s7 = scalar_select 0, %s6, %s4
  $region1: #{tpu_custom_call.1} parent=0
    #allocation2 [shape = 'u8[2048]{0}', space=vmem, size = 0x800, scoped, tag = 'input window, operand 0, single buffered']
    #allocation3 [shape = 's32[1]{0}', space=sflag, size = 0x4, scoped, tag = 'scoped memory for tpu_custom_call.1']
    #allocation4 [shape = 's32[1]{0}', space=sflag, size = 0x4, scoped, tag = 'scoped memory for tpu_custom_call.1']
    #allocation5 [shape = 'u8[2048]{0}', space=vmem, size = 0x800, scoped, tag = 'output window, operand 0, single buffered']
    %8 = vsyncpa [#allocation3], 0
    %9 = vsyncpa [#allocation4], 0
    // Predicated region
    $region2: #{tpu_custom_call.1} parent=1 // pred_check
      _
    $region3: #{tpu_custom_call.1} parent=1 // pred_check_branch
      %11 = sbr.rel (0) target = $region5
    $region4: #{tpu_custom_call.1} parent=1 // pred_region
      %s13 = ssub.s32 64, 64
      %14 = vsyncadd [#allocation3], %s13
      %s16 = sshll.u32 [#allocation2], 4
      %s17 = int_to_ptr.vmem [resolvable:$true] %s16
      %19 = dma.hbm_to_vmem [thread:$0]  %s0, 64, %s17, [#allocation3]
    $region5: #{tpu_custom_call.1} parent=1 // pred_fallthru
      _
    // Predicated region
    $region6: #{tpu_custom_call.1} parent=1 // pred_check
      _
    $region7: #{tpu_custom_call.1} parent=1 // pred_check_branch
      %21 = sbr.rel (0) target = $region9
    $region8: #{tpu_custom_call.1} parent=1 // pred_region
      _
    $region9: #{tpu_custom_call.1} parent=1 // pred_fallthru
      _
    // Predicated region
    $region10: #{tpu_custom_call.1} parent=1 // pred_check
      _
    $region11: #{tpu_custom_call.1} parent=1 // pred_check_branch
      %23 = sbr.rel (0) target = $region13
    $region12: #{tpu_custom_call.1} parent=1 // pred_region
      _
    $region13: #{tpu_custom_call.1} parent=1 // pred_fallthru
      _
    // Predicated region
    $region14: #{tpu_custom_call.1} parent=1 // pred_check
      _
    $region15: #{tpu_custom_call.1} parent=1 // pred_check_branch
      %25 = sbr.rel (0) target = $region17
    $region16: #{tpu_custom_call.1} parent=1 // pred_region
      %26 = dma.done [#allocation3], 64
    $region17: #{tpu_custom_call.1} parent=1 // pred_fallthru
      _
    %v27 = vld [vmem:[#allocation2] sm:$0xf]
    %v28 = vld [vmem:[%s1] sm:$0x1]
    %v30 = vlaneseq
    %v31 = vshrl.u32 %v30, 7
    %v32 = vsub.s32 0, %v31
    %v33 = vrot.slane %v28, %v32
    %v35 = vadd.f32 %v27, %v33
    %v36 = vld [vmem:[%s2] sm:$0x1]
    %v38 = vlaneseq
    %v39 = vshrl.u32 %v38, 7
    %v40 = vsub.s32 0, %v39
    %v41 = vrot.slane %v36, %v40
    %v43 = vmul.f32 %v35, %v41
    %44 = vst [vmem:[#allocation5] sm:$0xf] %v43
    // Predicated region
    $region18: #{tpu_custom_call.1} parent=1 // pred_check
      _
    $region19: #{tpu_custom_call.1} parent=1 // pred_check_branch
      %46 = sbr.rel (0) target = $region21
    $region20: #{tpu_custom_call.1} parent=1 // pred_region
      %s48 = ssub.s32 64, 64
      %49 = vsyncadd [#allocation4], %s48
      %s51 = sshll.u32 [#allocation5], 4
      %s52 = int_to_ptr.vmem [resolvable:$true] %s51
      %54 = dma.vmem_to_hbm [thread:$0]  %s52, 64, %s3, [#allocation4]
    $region21: #{tpu_custom_call.1} parent=1 // pred_fallthru
      _
    // Predicated region
    $region22: #{tpu_custom_call.1} parent=1 // pred_check
      _
    $region23: #{tpu_custom_call.1} parent=1 // pred_check_branch
      %56 = sbr.rel (0) target = $region25
    $region24: #{tpu_custom_call.1} parent=1 // pred_region
      %57 = dma.done [#allocation4], 64
    $region25: #{tpu_custom_call.1} parent=1 // pred_fallthru
      _
    %58 = vsyncpa [#allocation3], 1
    %59 = vsyncpa [#allocation4], 1

</llo_original>
